<compile_context>
chip_gen: v7x
topology: tpu7x:2x2x1
jax: 0.10.0
libtpu: 0.0.40
codegen_flags: <defaults>
</compile_context>

<pallas_src>
import jax
import jax.numpy as jnp
from jax.experimental import pallas as pl
from jax.experimental.pallas import tpu as pltpu

# ---- config (mirrors args.max_chain / args.max_evi_length) ----
BATCH = 2
MAX_CHAIN = 4            # args.max_chain
EVI_L = 4                # args.max_evi_length
N_EVENTS = 4             # events per chain -> SEQ = EVI_L * N_EVENTS
SEQ = EVI_L * N_EVENTS   # 16 tokens per chain
HIDDEN = 128
VOCAB = 64
N_TYPES = 2


# -----------------------------------------------------------------------------
# Fused kernel: embedding gather -> dense+mask+tanh -> end-weighted reasoner.
# One tile = `tc` whole chains = tm = tc * E event rows.
# -----------------------------------------------------------------------------
def xcar_fused_kernel(ids_ref, tty_ref, att_ref, sm_ref, endsel_ref, endsum_ref,
                      wemb_ref, temb_ref, encw_ref, encb_ref, rw_ref, rb_ref,
                      o_ref):
    tm = ids_ref.shape[0]            # event rows in this tile
    V = wemb_ref.shape[0]
    T = temb_ref.shape[0]

    # --- synthetic lm_encoder front-end: embedding gather as one-hot matmul ---
    # TODO(synk): real lm_encoder internals are external to the module source.
    ids = ids_ref[...]                                               # (tm, 1) i32
    one_hot = (jax.lax.broadcasted_iota(jnp.int32, (tm, V), 1) == ids
               ).astype(jnp.float32)                                 # (tm, V)
    emb = jnp.dot(one_hot, wemb_ref[...],
                  preferred_element_type=jnp.float32)                # (tm, H)

    tty = tty_ref[...]                                               # (tm, 1) i32
    for t in range(T):                                               # static, T=2
        emb = emb + (tty == t).astype(jnp.float32) * temb_ref[t:t + 1, :]

    x = emb * att_ref[...]                                           # attn mask

    # --- dense projection (bf16 MXU, f32 acc) + sentence-mask * tanh ---
    h = jnp.dot(x.astype(jnp.bfloat16), encw_ref[...],
                preferred_element_type=jnp.float32) + encb_ref[...]
    ev = jnp.tanh(h * sm_ref[...])                                   # (tm, H) f32

    # --- fused Reasoner: end-weighted per-chain sum, then linear score ---
    # z[n, :] = sum_e end[n, e] * ev[n*E + e, :]  (block-diagonal selection)
    z = jnp.dot(endsel_ref[...], ev, preferred_element_type=jnp.float32)
    score = jnp.sum(z * rw_ref[...], axis=-1, keepdims=True)         # (tc, 1)
    o_ref[...] = score + rb_ref[...] * endsum_ref[...]


# -----------------------------------------------------------------------------
# Full XCARModel.forward
# -----------------------------------------------------------------------------
def xcar_forward(params, input_ids, end_inds, sentence_mask, attention_mask,
                 token_type_ids):
    B, C, S = input_ids.shape
    N = B * C
    E = S // EVI_L

    # Tiny integer/mask glue: keep only the event-token columns, since the
    # reference discards everything else via event_embeddings[:, ::evi_l, :].
    # TODO(synk): valid because the stand-in encoder is per-token; a real
    #             contextual lm_encoder would need the full sequence encoded.
    ids_e = input_ids.reshape(N, S)[:, ::EVI_L].reshape(N * E, 1)
    tty_e = token_type_ids.reshape(N, S)[:, ::EVI_L].reshape(N * E, 1)
    att_e = attention_mask.reshape(N, S)[:, ::EVI_L].astype(
        jnp.float32).reshape(N * E, 1)
    sm_e = sentence_mask.reshape(N, S)[:, ::EVI_L].astype(
        jnp.float32).reshape(N * E, 1)

    endm = end_inds.reshape(N, E).astype(jnp.float32)                 # (N, E)
    # Block-diagonal end-mask selection: endsel[n, n*E + e] = end[n, e].
    chain_of_row = jnp.arange(N * E, dtype=jnp.int32)[None, :] // E   # (1, N*E)
    endsel = jnp.where(
        chain_of_row == jnp.arange(N, dtype=jnp.int32)[:, None],
        endm.reshape(1, N * E), 0.0)                                  # (N, N*E)
    endsum = jnp.sum(endm, axis=-1, keepdims=True)                    # (N, 1)

    V, H = params["word_emb"].shape
    T = params["type_emb"].shape[0]
    tc = N                  # chains per tile: single tile at this size
    tm = tc * E             # event rows per tile

    scores = pl.pallas_call(
        xcar_fused_kernel,
        out_shape=jax.ShapeDtypeStruct((N, 1), jnp.float32),
        grid_spec=pltpu.PrefetchScalarGridSpec(
            num_scalar_prefetch=0,
            grid=(N // tc,),
            in_specs=[
                pl.BlockSpec((tm, 1), lambda i: (i, 0)),    # event word ids
                pl.BlockSpec((tm, 1), lambda i: (i, 0)),    # event type ids
                pl.BlockSpec((tm, 1), lambda i: (i, 0)),    # attention mask
                pl.BlockSpec((tm, 1), lambda i: (i, 0)),    # sentence mask
                pl.BlockSpec((tc, tm), lambda i: (i, i)),   # end selection blk
                pl.BlockSpec((tc, 1), lambda i: (i, 0)),    # end row-sum
                pl.BlockSpec((V, H), lambda i: (0, 0)),     # word emb (resident)
                pl.BlockSpec((T, H), lambda i: (0, 0)),     # type emb (resident)
                pl.BlockSpec((H, H), lambda i: (0, 0)),     # dense weight (bf16)
                pl.BlockSpec((1, H), lambda i: (0, 0)),     # dense bias
                pl.BlockSpec((1, H), lambda i: (0, 0)),     # reasoner weight
                pl.BlockSpec((1, 1), lambda i: (0, 0)),     # reasoner bias
            ],
            out_specs=pl.BlockSpec((tc, 1), lambda i: (i, 0)),
        ),
        compiler_params=pltpu.CompilerParams(
            dimension_semantics=("parallel",)),
    )(ids_e, tty_e, att_e, sm_e, endsel, endsum,
      params["word_emb"], params["type_emb"],
      params["enc_w"].astype(jnp.bfloat16), params["enc_b"],
      params["r_w"], params["r_b"])

    return scores.reshape(B, C)


# -----------------------------------------------------------------------------
# Pure-JAX f32 reference (mirrors the previous, reviewed-correct version).
# -----------------------------------------------------------------------------
def xcar_reference(params, input_ids, end_inds, sentence_mask, attention_mask,
                   token_type_ids):
    B, C, S = input_ids.shape
    N = B * C
    ids = input_ids.reshape(N, S)
    att = attention_mask.reshape(N, S).astype(jnp.float32)
    tty = token_type_ids.reshape(N, S)
    smask = sentence_mask.reshape(N, S).astype(jnp.float32)
    endm = end_inds.reshape(N, -1).astype(jnp.float32)

    emb = params["word_emb"][ids] + params["type_emb"][tty]
    emb = emb * att[..., None]
    h = emb @ params["enc_w"] + params["enc_b"]
    ev = jnp.tanh(h * smask[..., None])
    events = ev[:, ::EVI_L, :]                                        # (N, E, H)
    s = jnp.sum(events * params["r_w"][:, None, :], axis=-1) + params["r_b"]
    return jnp.sum(s * endm, axis=-1).reshape(B, C)


if __name__ == "__main__":
    key = jax.random.PRNGKey(0)
    k1, k2, k3, k4, k5, k6, k7, k8 = jax.random.split(key, 8)

    input_ids = jax.random.randint(k1, (BATCH, MAX_CHAIN, SEQ), 0, VOCAB,
                                   dtype=jnp.int32)
    token_type_ids = jax.random.randint(k2, (BATCH, MAX_CHAIN, SEQ), 0, N_TYPES,
                                        dtype=jnp.int32)
    attention_mask = jnp.ones((BATCH, MAX_CHAIN, SEQ), jnp.int32)
    sentence_mask = jax.random.bernoulli(
        k3, 0.8, (BATCH, MAX_CHAIN, SEQ)).astype(jnp.float32)
    end_inds = jax.random.bernoulli(
        k4, 0.5, (BATCH, MAX_CHAIN, N_EVENTS)).astype(jnp.float32)

    params = {
        "word_emb": 0.02 * jax.random.normal(k5, (VOCAB, HIDDEN), jnp.float32),
        "type_emb": 0.02 * jax.random.normal(k6, (N_TYPES, HIDDEN), jnp.float32),
        "enc_w":    0.05 * jax.random.normal(k7, (HIDDEN, HIDDEN), jnp.float32),
        "enc_b":    jnp.zeros((1, HIDDEN), jnp.float32),
        "r_w":      0.05 * jax.random.normal(k8, (1, HIDDEN), jnp.float32),
        "r_b":      jnp.zeros((1, 1), jnp.float32),
    }

    scores = jax.jit(xcar_forward)(params, input_ids, end_inds, sentence_mask,
                                   attention_mask, token_type_ids)
    jax.block_until_ready(scores)

    ref = xcar_reference(params, input_ids, end_inds, sentence_mask,
                         attention_mask, token_type_ids)
    max_err = float(jnp.max(jnp.abs(scores - ref)))

    assert scores.shape == (BATCH, MAX_CHAIN)
    assert scores.dtype == jnp.float32
    assert max_err < 5e-2, f"mismatch vs f32 reference: {max_err}"
    print("KERNEL_OK")
</pallas_src>

<mosaic_0001>
module attributes {stable_mosaic.version = 11 : i64} {
  func.func @xcar_fused_kernel(%arg0: i32, %arg1: memref<32x1xi32, #tpu.memory_space<vmem>>, %arg2: memref<32x1xi32, #tpu.memory_space<vmem>>, %arg3: memref<32x1xf32, #tpu.memory_space<vmem>>, %arg4: memref<32x1xf32, #tpu.memory_space<vmem>>, %arg5: memref<8x32xf32, #tpu.memory_space<vmem>>, %arg6: memref<8x1xf32, #tpu.memory_space<vmem>>, %arg7: memref<64x128xf32, #tpu.memory_space<vmem>>, %arg8: memref<2x128xf32, #tpu.memory_space<vmem>>, %arg9: memref<128x128xbf16, #tpu.memory_space<vmem>>, %arg10: memref<1x128xf32, #tpu.memory_space<vmem>>, %arg11: memref<1x128xf32, #tpu.memory_space<vmem>>, %arg12: memref<1x1xf32, #tpu.memory_space<vmem>>, %arg13: memref<8x1xf32, #tpu.memory_space<vmem>>) attributes {dimension_semantics = [#tpu.dimension_semantics<parallel>], iteration_bounds = array<i64: 1>, scalar_prefetch = 0 : i64, scratch_operands = 0 : i64, tpu.core_type = #tpu.core_type<tc>, window_params = [{transform_indices = @transform_0, window_bounds = array<i64: 32, 1>}, {transform_indices = @transform_1, window_bounds = array<i64: 32, 1>}, {transform_indices = @transform_2, window_bounds = array<i64: 32, 1>}, {transform_indices = @transform_3, window_bounds = array<i64: 32, 1>}, {transform_indices = @transform_4, window_bounds = array<i64: 8, 32>}, {transform_indices = @transform_5, window_bounds = array<i64: 8, 1>}, {pipeline_mode = #tpu.pipeline_mode<synchronous>, transform_indices = @transform_6, window_bounds = array<i64: 64, 128>}, {pipeline_mode = #tpu.pipeline_mode<synchronous>, transform_indices = @transform_7, window_bounds = array<i64: 2, 128>}, {pipeline_mode = #tpu.pipeline_mode<synchronous>, transform_indices = @transform_8, window_bounds = array<i64: 128, 128>}, {pipeline_mode = #tpu.pipeline_mode<synchronous>, transform_indices = @transform_9, window_bounds = array<i64: 1, 128>}, {pipeline_mode = #tpu.pipeline_mode<synchronous>, transform_indices = @transform_10, window_bounds = array<i64: 1, 128>}, {pipeline_mode = #tpu.pipeline_mode<synchronous>, transform_indices = @transform_11, window_bounds = array<i64: 1, 1>}, {transform_indices = @transform_12, window_bounds = array<i64: 8, 1>}]} {
    %c0 = arith.constant 0 : index
    %c0_0 = arith.constant 0 : index
    %0 = vector.load %arg1[%c0, %c0_0] : memref<32x1xi32, #tpu.memory_space<vmem>>, vector<32x1xi32>
    %1 = tpu.iota {dimensions = array<i32: 1>} : vector<32x64xi32>
    %2 = vector.broadcast %0 : vector<32x1xi32> to vector<32x64xi32>
    %3 = arith.cmpi eq, %1, %2 : vector<32x64xi32>
    %4 = arith.extui %3 : vector<32x64xi1> to vector<32x64xi32>
    %5 = arith.sitofp %4 : vector<32x64xi32> to vector<32x64xf32>
    %c0_1 = arith.constant 0 : index
    %c0_2 = arith.constant 0 : index
    %6 = vector.load %arg7[%c0_1, %c0_2] : memref<64x128xf32, #tpu.memory_space<vmem>>, vector<64x128xf32>
    %cst = arith.constant dense<0.000000e+00> : vector<32x128xf32>
    %7 = tpu.matmul %5, %6, %cst {dimension_numbers = #tpu.dot_dimension_numbers<[1], [0], [0], [1], [0, 0, 1, 1], [], []>} : vector<32x64xf32>, vector<64x128xf32>, vector<32x128xf32> -> vector<32x128xf32>
    %c0_3 = arith.constant 0 : index
    %c0_4 = arith.constant 0 : index
    %8 = vector.load %arg2[%c0_3, %c0_4] : memref<32x1xi32, #tpu.memory_space<vmem>>, vector<32x1xi32>
    %c0_i32 = arith.constant 0 : i32
    %9 = vector.broadcast %c0_i32 : i32 to vector<32x1xi32>
    %10 = arith.cmpi eq, %8, %9 : vector<32x1xi32>
    %11 = arith.extui %10 : vector<32x1xi1> to vector<32x1xi32>
    %12 = arith.sitofp %11 : vector<32x1xi32> to vector<32x1xf32>
    %c0_5 = arith.constant 0 : index
    %c0_6 = arith.constant 0 : index
    %13 = vector.load %arg8[%c0_5, %c0_6] : memref<2x128xf32, #tpu.memory_space<vmem>>, vector<1x128xf32>
    %14 = vector.broadcast %12 : vector<32x1xf32> to vector<32x128xf32>
    %15 = vector.broadcast %13 : vector<1x128xf32> to vector<32x128xf32>
    %16 = arith.mulf %14, %15 : vector<32x128xf32>
    %17 = arith.addf %7, %16 : vector<32x128xf32>
    %c1_i32 = arith.constant 1 : i32
    %18 = vector.broadcast %c1_i32 : i32 to vector<32x1xi32>
    %19 = arith.cmpi eq, %8, %18 : vector<32x1xi32>
    %20 = arith.extui %19 : vector<32x1xi1> to vector<32x1xi32>
    %21 = arith.sitofp %20 : vector<32x1xi32> to vector<32x1xf32>
    %c1 = arith.constant 1 : index
    %c0_7 = arith.constant 0 : index
    %22 = vector.load %arg8[%c1, %c0_7] : memref<2x128xf32, #tpu.memory_space<vmem>>, vector<1x128xf32>
    %23 = vector.broadcast %21 : vector<32x1xf32> to vector<32x128xf32>
    %24 = vector.broadcast %22 : vector<1x128xf32> to vector<32x128xf32>
    %25 = arith.mulf %23, %24 : vector<32x128xf32>
    %26 = arith.addf %17, %25 : vector<32x128xf32>
    %c0_8 = arith.constant 0 : index
    %c0_9 = arith.constant 0 : index
    %27 = vector.load %arg3[%c0_8, %c0_9] : memref<32x1xf32, #tpu.memory_space<vmem>>, vector<32x1xf32>
    %28 = vector.broadcast %27 : vector<32x1xf32> to vector<32x128xf32>
    %29 = arith.mulf %26, %28 : vector<32x128xf32>
    %30 = arith.truncf %29 : vector<32x128xf32> to vector<32x128xbf16>
    %c0_10 = arith.constant 0 : index
    %c0_11 = arith.constant 0 : index
    %31 = vector.load %arg9[%c0_10, %c0_11] : memref<128x128xbf16, #tpu.memory_space<vmem>>, vector<128x128xbf16>
    %cst_12 = arith.constant dense<0.000000e+00> : vector<32x128xf32>
    %32 = tpu.matmul %30, %31, %cst_12 {dimension_numbers = #tpu.dot_dimension_numbers<[1], [0], [0], [1], [0, 0, 1, 1], [], []>} : vector<32x128xbf16>, vector<128x128xbf16>, vector<32x128xf32> -> vector<32x128xf32>
    %c0_13 = arith.constant 0 : index
    %c0_14 = arith.constant 0 : index
    %33 = vector.load %arg10[%c0_13, %c0_14] : memref<1x128xf32, #tpu.memory_space<vmem>>, vector<1x128xf32>
    %34 = vector.broadcast %33 : vector<1x128xf32> to vector<32x128xf32>
    %35 = arith.addf %32, %34 : vector<32x128xf32>
    %c0_15 = arith.constant 0 : index
    %c0_16 = arith.constant 0 : index
    %36 = vector.load %arg4[%c0_15, %c0_16] : memref<32x1xf32, #tpu.memory_space<vmem>>, vector<32x1xf32>
    %37 = vector.broadcast %36 : vector<32x1xf32> to vector<32x128xf32>
    %38 = arith.mulf %35, %37 : vector<32x128xf32>
    %39 = math.tanh %38 : vector<32x128xf32>
    %c0_17 = arith.constant 0 : index
    %c0_18 = arith.constant 0 : index
    %40 = vector.load %arg5[%c0_17, %c0_18] : memref<8x32xf32, #tpu.memory_space<vmem>>, vector<8x32xf32>
    %cst_19 = arith.constant dense<0.000000e+00> : vector<8x128xf32>
    %41 = tpu.matmul %40, %39, %cst_19 {dimension_numbers = #tpu.dot_dimension_numbers<[1], [0], [0], [1], [0, 0, 1, 1], [], []>} : vector<8x32xf32>, vector<32x128xf32>, vector<8x128xf32> -> vector<8x128xf32>
    %c0_20 = arith.constant 0 : index
    %c0_21 = arith.constant 0 : index
    %42 = vector.load %arg11[%c0_20, %c0_21] : memref<1x128xf32, #tpu.memory_space<vmem>>, vector<1x128xf32>
    %43 = vector.broadcast %42 : vector<1x128xf32> to vector<8x128xf32>
    %44 = arith.mulf %41, %43 : vector<8x128xf32>
    %cst_22 = arith.constant dense<0.000000e+00> : vector<8xf32>
    %45 = vector.multi_reduction <add>, %44, %cst_22 [1] : vector<8x128xf32> to vector<8xf32>
    %46 = vector.shape_cast %45 : vector<8xf32> to vector<8x1xf32>
    %c0_23 = arith.constant 0 : index
    %c0_24 = arith.constant 0 : index
    %47 = vector.load %arg12[%c0_23, %c0_24] : memref<1x1xf32, #tpu.memory_space<vmem>>, vector<1x1xf32>
    %c0_25 = arith.constant 0 : index
    %c0_26 = arith.constant 0 : index
    %48 = vector.load %arg6[%c0_25, %c0_26] : memref<8x1xf32, #tpu.memory_space<vmem>>, vector<8x1xf32>
    %49 = vector.broadcast %47 : vector<1x1xf32> to vector<8x1xf32>
    %50 = arith.mulf %49, %48 : vector<8x1xf32>
    %51 = arith.addf %46, %50 : vector<8x1xf32>
    %c0_27 = arith.constant 0 : index
    %c0_28 = arith.constant 0 : index
    %52 = vector.load %arg13[%c0_27, %c0_28] : memref<8x1xf32, #tpu.memory_space<vmem>>, vector<8x1xf32>
    tpu.vector_store %arg13[%c0_27, %c0_28], %51 {strides = array<i32>} : memref<8x1xf32, #tpu.memory_space<vmem>>, vector<8x1xf32>,
    return
  }
  func.func @transform_0(%arg0: i32) -> (i32, i32) {
    %c0_i32 = arith.constant 0 : i32
    %c0_i32_0 = arith.constant 0 : i32
    return %arg0, %c0_i32 : i32, i32
  }
  func.func @transform_1(%arg0: i32) -> (i32, i32) {
    %c0_i32 = arith.constant 0 : i32
    %c0_i32_0 = arith.constant 0 : i32
    return %arg0, %c0_i32 : i32, i32
  }
  func.func @transform_2(%arg0: i32) -> (i32, i32) {
    %c0_i32 = arith.constant 0 : i32
    %c0_i32_0 = arith.constant 0 : i32
    return %arg0, %c0_i32 : i32, i32
  }
  func.func @transform_3(%arg0: i32) -> (i32, i32) {
    %c0_i32 = arith.constant 0 : i32
    %c0_i32_0 = arith.constant 0 : i32
    return %arg0, %c0_i32 : i32, i32
  }
  func.func @transform_4(%arg0: i32) -> (i32, i32) {
    %c0_i32 = arith.constant 0 : i32
    return %arg0, %arg0 : i32, i32
  }
  func.func @transform_5(%arg0: i32) -> (i32, i32) {
    %c0_i32 = arith.constant 0 : i32
    %c0_i32_0 = arith.constant 0 : i32
    return %arg0, %c0_i32 : i32, i32
  }
  func.func @transform_6(%arg0: i32) -> (i32, i32) {
    %c0_i32 = arith.constant 0 : i32
    %c0_i32_0 = arith.constant 0 : i32
    %c0_i32_1 = arith.constant 0 : i32
    return %c0_i32, %c0_i32_0 : i32, i32
  }
  func.func @transform_7(%arg0: i32) -> (i32, i32) {
    %c0_i32 = arith.constant 0 : i32
    %c0_i32_0 = arith.constant 0 : i32
    %c0_i32_1 = arith.constant 0 : i32
    return %c0_i32, %c0_i32_0 : i32, i32
  }
  func.func @transform_8(%arg0: i32) -> (i32, i32) {
    %c0_i32 = arith.constant 0 : i32
    %c0_i32_0 = arith.constant 0 : i32
    %c0_i32_1 = arith.constant 0 : i32
    return %c0_i32, %c0_i32_0 : i32, i32
  }
  func.func @transform_9(%arg0: i32) -> (i32, i32) {
    %c0_i32 = arith.constant 0 : i32
    %c0_i32_0 = arith.constant 0 : i32
    %c0_i32_1 = arith.constant 0 : i32
    return %c0_i32, %c0_i32_0 : i32, i32
  }
  func.func @transform_10(%arg0: i32) -> (i32, i32) {
    %c0_i32 = arith.constant 0 : i32
    %c0_i32_0 = arith.constant 0 : i32
    %c0_i32_1 = arith.constant 0 : i32
    return %c0_i32, %c0_i32_0 : i32, i32
  }
  func.func @transform_11(%arg0: i32) -> (i32, i32) {
    %c0_i32 = arith.constant 0 : i32
    %c0_i32_0 = arith.constant 0 : i32
    %c0_i32_1 = arith.constant 0 : i32
    return %c0_i32, %c0_i32_0 : i32, i32
  }
  func.func @transform_12(%arg0: i32) -> (i32, i32) {
    %c0_i32 = arith.constant 0 : i32
    %c0_i32_0 = arith.constant 0 : i32
    return %arg0, %c0_i32 : i32, i32
  }
}

</mosaic_0001>

<llo_original>
// kernel: xcar_forward.1
$region0: #{xcar_forward.1}
  #allocation0 [shape = 'u32[]', space=smem, size = 0x4, offset = 0x4, fixed_abs, tag = 'smem constant byte address 0x4 - core index']
  #allocation1 [shape = 'u32[144,128]{1,0:T(1,128)}', space=vmem, size = 0x12000, scoped, tag = 'internal scratch']
  #allocation2 [shape = 'f32[1,1]{1,0:T(1,128)S(1)}', space=vmem, size = 0x200, scoped, tag = 'scoped memory for xcar_forward.1']
  %s0 = inlined_call_operand.vmem [shape: s32[32,1], index: 0, kind: input, shape index: {}]
  %s1 = inlined_call_operand.vmem [shape: s32[32,1], index: 1, kind: input, shape index: {}]
  %s2 = inlined_call_operand.vmem [shape: f32[32,1], index: 2, kind: input, shape index: {}]
  %s3 = inlined_call_operand.vmem [shape: f32[32,1], index: 3, kind: input, shape index: {}]
  %s4 = inlined_call_operand.vmem [shape: f32[8,32], index: 4, kind: input, shape index: {}]
  %s5 = inlined_call_operand.vmem [shape: f32[8,1], index: 5, kind: input, shape index: {}]
  %s6 = inlined_call_operand.vmem [shape: f32[64,128], index: 6, kind: input, shape index: {}]
  %s7 = inlined_call_operand.vmem [shape: f32[2,128], index: 7, kind: input, shape index: {}]
  %s8 = inlined_call_operand.vmem [shape: bf16[128,128], index: 8, kind: input, shape index: {}]
  %s9 = inlined_call_operand.vmem [shape: f32[1,128], index: 9, kind: input, shape index: {}]
  %s10 = inlined_call_operand.vmem [shape: f32[1,128], index: 10, kind: input, shape index: {}]
  %s11 = inlined_call_operand.<no memory space> [shape: f32[1,1], index: 11, kind: input, shape index: {}]
  %s12 = inlined_call_operand.vmem [shape: f32[8,1], index: 12, kind: output, shape index: {}]
  %s13 = sld [smem:[#allocation0]]
  $region58: #{xcar_forward.1} parent=0
    _
  %s15 = ssub.s32 1, %s13
  %s16 = scalar_select 0, %s15, %s13
  %v17 = vstv %s11
  %18 = vst [vmem:[#allocation2] sm:$0x1] %v17
  // Predicated region
  $region2: #{xcar_forward.1} parent=0 // pred_check
    _
  $region3: #{xcar_forward.1} parent=0 // pred_check_branch
    %20 = sbr.rel (0) target = $region5
  $region4: #{xcar_forward.1} parent=0 // pred_region
    _
  $region5: #{xcar_forward.1} parent=0 // pred_fallthru
    _
  // Predicated region
  $region6: #{xcar_forward.1} parent=0 // pred_check
    _
  $region7: #{xcar_forward.1} parent=0 // pred_check_branch
    %22 = sbr.rel (0) target = $region9
  $region8: #{xcar_forward.1} parent=0 // pred_region
    _
  $region9: #{xcar_forward.1} parent=0 // pred_fallthru
    _
  // Predicated region
  $region10: #{xcar_forward.1} parent=0 // pred_check
    _
  $region11: #{xcar_forward.1} parent=0 // pred_check_branch
    %24 = sbr.rel (0) target = $region13
  $region12: #{xcar_forward.1} parent=0 // pred_region
    _
  $region13: #{xcar_forward.1} parent=0 // pred_fallthru
    _
  // Predicated region
  $region14: #{xcar_forward.1} parent=0 // pred_check
    _
  $region15: #{xcar_forward.1} parent=0 // pred_check_branch
    %26 = sbr.rel (0) target = $region17
  $region16: #{xcar_forward.1} parent=0 // pred_region
    _
  $region17: #{xcar_forward.1} parent=0 // pred_fallthru
    _
  // Predicated region
  $region18: #{xcar_forward.1} parent=0 // pred_check
    _
  $region19: #{xcar_forward.1} parent=0 // pred_check_branch
    %28 = sbr.rel (0) target = $region21
  $region20: #{xcar_forward.1} parent=0 // pred_region
    _
  $region21: #{xcar_forward.1} parent=0 // pred_fallthru
    _
  // Predicated region
  $region22: #{xcar_forward.1} parent=0 // pred_check
    _
  $region23: #{xcar_forward.1} parent=0 // pred_check_branch
    %30 = sbr.rel (0) target = $region25
  $region24: #{xcar_forward.1} parent=0 // pred_region
    _
  $region25: #{xcar_forward.1} parent=0 // pred_fallthru
    _
  // Predicated region
  $region26: #{xcar_forward.1} parent=0 // pred_check
    _
  $region27: #{xcar_forward.1} parent=0 // pred_check_branch
    %32 = sbr.rel (0) target = $region29
  $region28: #{xcar_forward.1} parent=0 // pred_region
    _
  $region29: #{xcar_forward.1} parent=0 // pred_fallthru
    _
  // Predicated region
  $region30: #{xcar_forward.1} parent=0 // pred_check
    _
  $region31: #{xcar_forward.1} parent=0 // pred_check_branch
    %34 = sbr.rel (0) target = $region33
  $region32: #{xcar_forward.1} parent=0 // pred_region
    _
  $region33: #{xcar_forward.1} parent=0 // pred_fallthru
    _
  // Predicated region
  $region34: #{xcar_forward.1} parent=0 // pred_check
    _
  $region35: #{xcar_forward.1} parent=0 // pred_check_branch
    %36 = sbr.rel (0) target = $region37
  $region36: #{xcar_forward.1} parent=0 // pred_region
    _
  $region37: #{xcar_forward.1} parent=0 // pred_fallthru
    _
  // Predicated region
  $region38: #{xcar_forward.1} parent=0 // pred_check
    _
  $region39: #{xcar_forward.1} parent=0 // pred_check_branch
    %38 = sbr.rel (0) target = $region41
  $region40: #{xcar_forward.1} parent=0 // pred_region
    _
  $region41: #{xcar_forward.1} parent=0 // pred_fallthru
    _
  // Predicated region
  $region42: #{xcar_forward.1} parent=0 // pred_check
    _
  $region43: #{xcar_forward.1} parent=0 // pred_check_branch
    %40 = sbr.rel (0) target = $region45
  $region44: #{xcar_forward.1} parent=0 // pred_region
    _
  $region45: #{xcar_forward.1} parent=0 // pred_fallthru
    _
  // Predicated region
  $region46: #{xcar_forward.1} parent=0 // pred_check
    _
  $region47: #{xcar_forward.1} parent=0 // pred_check_branch
    %42 = sbr.rel (0) target = $region49
  $region48: #{xcar_forward.1} parent=0 // pred_region
    _
  $region49: #{xcar_forward.1} parent=0 // pred_fallthru
    _
  %v44 = vld [vmem:[%s0] sm:$0xff]
  %v45 = vld [vmem:[%s0 + $0x8] sm:$0xff]
  %v46 = vld [vmem:[%s0 + $0x10] sm:$0xff]
  %v47 = vld [vmem:[%s0 + $0x18] sm:$0xff]
  %v48 = vlaneseq
  %v49 = vand.u32 %v48, 127
  %50 = vset.pattern.permute.xlu0 0
  %51 = vperm.xlu0 %50, %v44
  %v52 = vpop.permute.xlu0 %51
  %53 = vset.pattern.permute.xlu0 0
  %54 = vperm.xlu0 %53, %v45
  %v55 = vpop.permute.xlu0 %54
  %56 = vset.pattern.permute.xlu0 0
  %57 = vperm.xlu0 %56, %v46
  %v58 = vpop.permute.xlu0 %57
  %59 = vset.pattern.permute.xlu0 0
  %60 = vperm.xlu0 %59, %v47
  %v61 = vpop.permute.xlu0 %60
  %vm62 = vcmp.eq.s32.totalorder %v49, %v52
  %vm63 = vcmp.eq.s32.totalorder %v49, %v55
  %vm64 = vcmp.eq.s32.totalorder %v49, %v58
  %vm65 = vcmp.eq.s32.totalorder %v49, %v61
  %v66 = vsel %vm62, 1, 0
  %v67 = vsel %vm63, 1, 0
  %v68 = vsel %vm64, 1, 0
  %v69 = vsel %vm65, 1, 0
  %v70 = vcvt.s32.f32 %v66
  %v71 = vcvt.s32.f32 %v67
  %v72 = vcvt.s32.f32 %v68
  %v73 = vcvt.s32.f32 %v69
  %v74 = vld [vmem:[%s6] sm:$0xff]
  %v75 = vld [vmem:[%s6 + $0x8] sm:$0xff]
  %v76 = vld [vmem:[%s6 + $0x10] sm:$0xff]
  %v77 = vld [vmem:[%s6 + $0x18] sm:$0xff]
  %v78 = vld [vmem:[%s6 + $0x20] sm:$0xff]
  %v79 = vld [vmem:[%s6 + $0x28] sm:$0xff]
  %v80 = vld [vmem:[%s6 + $0x30] sm:$0xff]
  %v81 = vld [vmem:[%s6 + $0x38] sm:$0xff]
  %v82 = vld [vmem:[%s1] sm:$0xff]
  %v83 = vld [vmem:[%s1 + $0x8] sm:$0xff]
  %v84 = vld [vmem:[%s1 + $0x10] sm:$0xff]
  %v85 = vld [vmem:[%s1 + $0x18] sm:$0xff]
  %vm86 = vcmp.eq.s32.totalorder %v82, 0
  %vm87 = vcmp.eq.s32.totalorder %v83, 0
  %vm88 = vcmp.eq.s32.totalorder %v84, 0
  %vm89 = vcmp.eq.s32.totalorder %v85, 0
  %v90 = vsel %vm86, 1, 0
  %v91 = vsel %vm87, 1, 0
  %v92 = vsel %vm88, 1, 0
  %v93 = vsel %vm89, 1, 0
  %v94 = vcvt.s32.f32 %v90
  %v95 = vcvt.s32.f32 %v91
  %v96 = vcvt.s32.f32 %v92
  %v97 = vcvt.s32.f32 %v93
  %v98 = vld [vmem:[%s7] sm:$0x1]
  %100 = vset.pattern.permute.xlu0 0
  %101 = vperm.xlu0 %100, %v94
  %v102 = vpop.permute.xlu0 %101
  %105 = vset.pattern.permute.xlu0 0
  %106 = vperm.xlu0 %105, %v95
  %v107 = vpop.permute.xlu0 %106
  %110 = vset.pattern.permute.xlu0 0
  %111 = vperm.xlu0 %110, %v96
  %v112 = vpop.permute.xlu0 %111
  %115 = vset.pattern.permute.xlu0 0
  %116 = vperm.xlu0 %115, %v97
  %v117 = vpop.permute.xlu0 %116
  %v119 = vlaneseq
  %v120 = vshrl.u32 %v119, 7
  %v121 = vsub.s32 0, %v120
  %v122 = vrot.slane %v98, %v121
  %v123 = vmul.f32 %v102, %v122
  %v124 = vmul.f32 %v107, %v122
  %v125 = vmul.f32 %v112, %v122
  %v126 = vmul.f32 %v117, %v122
  %vm127 = vcmask 523264
  %v129 = vsel %vm127, %v70, 0
  %v132 = vsel %vm127, %v71, 0
  %v135 = vsel %vm127, %v72, 0
  %v138 = vsel %vm127, %v73, 0
  %140 = vmatprep.subr.mxu0 0.0
  %141 = vmatpush1.msra.mxu0 %v74
  %142 = vmatprep.subr.mxu0 0.0
  %143 = vmatpush1.msra.mxu0 %v75
  %144 = vmatprep.subr.mxu0 0.0
  %145 = vmatpush1.msra.mxu0 %v76
  %146 = vmatprep.subr.mxu0 0.0
  %147 = vmatpush1.msra.mxu0 %v77
  %148 = vmatprep.subr.mxu0 0.0
  %149 = vmatpush1.msra.mxu0 %v78
  %150 = vmatprep.subr.mxu0 0.0
  %151 = vmatpush1.msra.mxu0 %v79
  %152 = vmatprep.subr.mxu0 0.0
  %153 = vmatpush1.msra.mxu0 %v80
  %154 = vmatprep.subr.mxu0 0.0
  %155 = vmatpush1.msra.mxu0 %v81
  %156 = vmatprep.subr.mxu0 0.0
  %157 = vmatpush1.msra.mxu0 0.0
  %158 = vmatprep.subr.mxu0 0.0
  %159 = vmatpush1.msra.mxu0 0.0
  %160 = vmatprep.subr.mxu0 0.0
  %161 = vmatpush1.msra.mxu0 0.0
  %162 = vmatprep.subr.mxu0 0.0
  %163 = vmatpush1.msra.mxu0 0.0
  %164 = vmatprep.subr.mxu0 0.0
  %165 = vmatpush1.msra.mxu0 0.0
  %166 = vmatprep.subr.mxu0 0.0
  %167 = vmatpush1.msra.mxu0 0.0
  %168 = vmatprep.subr.mxu0 0.0
  %169 = vmatpush1.msra.mxu0 0.0
  %170 = vmatprep.subr.mxu0 0.0
  %171 = vmatpush1.msra.mxu0 0.0
  %172 = vmatprep.subr.mxu0 0.0
  %173 = vmatpush1.msra.mxu0 0.0
  %174 = vmatprep.subr.mxu0 0.0
  %175 = vmatpush1.msra.mxu0 0.0
  %176 = vmatprep.subr.mxu0 0.0
  %177 = vmatpush1.msra.mxu0 0.0
  %178 = vmatprep.subr.mxu0 0.0
  %179 = vmatpush1.msra.mxu0 0.0
  %180 = vmatprep.subr.mxu0 0.0
  %181 = vmatpush1.msra.mxu0 0.0
  %182 = vmatprep.subr.mxu0 0.0
  %183 = vmatpush1.msra.mxu0 0.0
  %184 = vmatprep.subr.mxu0 0.0
  %185 = vmatpush1.msra.mxu0 0.0
  %186 = vmatprep.subr.mxu0 0.0
  %187 = vmatpush1.msra.mxu0 0.0
  %188 = vmatprep.subr.mxu0 0.0
  %189 = vmatpush1.msra.mxu0 0.0
  %190 = vmatprep.subr.mxu0 0.0
  %191 = vmatpush1.msra.mxu0 0.0
  %192 = vmatprep.subr.mxu0 0.0
  %193 = vmatpush1.msra.mxu0 0.0
  %194 = vmatprep.subr.mxu0 0.0
  %195 = vmatpush1.msra.mxu0 0.0
  %196 = vmatprep.subr.mxu0 0.0
  %197 = vmatpush1.msra.mxu0 0.0
  %198 = vmatprep.subr.mxu0 0.0
  %199 = vmatpush1.msra.mxu0 0.0
  %200 = vmatprep.subr.mxu0 0.0
  %201 = vmatpush1.msra.mxu0 0.0
  %202 = vmatprep.subr.mxu0 0.0
  %203 = vmatpush1.msra.mxu0 0.0
  %204 = vmatprep.mubr.f32.mxu0 0.0
  %205 = vmatmul.mubr.f32.gmra.mrb[0].mxu0 %v129
  %v206 = vpop.f32.mrb[0].mxu0
  %v207 = vadd.f32 %v123, %v206
  %v208 = vpop.f32.mrb[0].mxu0
  %209 = vmatprep.mubr.f32.mxu0 0.0
  %210 = vmatmul.mubr.f32.gmra.mrb[0].mxu0 %v132
  %v211 = vpop.f32.mrb[0].mxu0
  %v212 = vadd.f32 %v124, %v211
  %v213 = vpop.f32.mrb[0].mxu0
  %214 = vmatprep.mubr.f32.mxu0 0.0
  %215 = vmatmul.mubr.f32.gmra.mrb[0].mxu0 %v135
  %v216 = vpop.f32.mrb[0].mxu0
  %v217 = vadd.f32 %v125, %v216
  %v218 = vpop.f32.mrb[0].mxu0
  %219 = vmatprep.mubr.f32.mxu0 0.0
  %220 = vmatmul.mubr.f32.gmra.mrb[0].mxu0 %v138
  %v221 = vpop.f32.mrb[0].mxu0
  %v222 = vadd.f32 %v126, %v221
  %v223 = vpop.f32.mrb[0].mxu0
  %224 = vdwg.mxu0
  %vm225 = vcmp.eq.s32.totalorder %v82, 1
  %vm226 = vcmp.eq.s32.totalorder %v83, 1
  %vm227 = vcmp.eq.s32.totalorder %v84, 1
  %vm228 = vcmp.eq.s32.totalorder %v85, 1
  %v229 = vsel %vm225, 1, 0
  %v230 = vsel %vm226, 1, 0
  %v231 = vsel %vm227, 1, 0
  %v232 = vsel %vm228, 1, 0
  %v233 = vcvt.s32.f32 %v229
  %v234 = vcvt.s32.f32 %v230
  %v235 = vcvt.s32.f32 %v231
  %v236 = vcvt.s32.f32 %v232
  %v237 = vld [vmem:[%s7 + $0x1] sm:$0x1]
  %239 = vset.pattern.permute.xlu0 0
  %240 = vperm.xlu0 %239, %v233
  %v241 = vpop.permute.xlu0 %240
  %244 = vset.pattern.permute.xlu0 0
  %245 = vperm.xlu0 %244, %v234
  %v246 = vpop.permute.xlu0 %245
  %249 = vset.pattern.permute.xlu0 0
  %250 = vperm.xlu0 %249, %v235
  %v251 = vpop.permute.xlu0 %250
  %254 = vset.pattern.permute.xlu0 0
  %255 = vperm.xlu0 %254, %v236
  %v256 = vpop.permute.xlu0 %255
  %v258 = vlaneseq
  %v259 = vshrl.u32 %v258, 7
  %v260 = vsub.s32 0, %v259
  %v261 = vrot.slane %v237, %v260
  %v262 = vmul.f32 %v241, %v261
  %v263 = vmul.f32 %v246, %v261
  %v264 = vmul.f32 %v251, %v261
  %v265 = vmul.f32 %v256, %v261
  %v266 = vadd.f32 %v207, %v262
  %v267 = vadd.f32 %v212, %v263
  %v268 = vadd.f32 %v217, %v264
  %v269 = vadd.f32 %v222, %v265
  %v270 = vld [vmem:[%s2] sm:$0xff]
  %v271 = vld [vmem:[%s2 + $0x8] sm:$0xff]
  %v272 = vld [vmem:[%s2 + $0x10] sm:$0xff]
  %v273 = vld [vmem:[%s2 + $0x18] sm:$0xff]
  %275 = vset.pattern.permute.xlu0 0
  %276 = vperm.xlu0 %275, %v270
  %v277 = vpop.permute.xlu0 %276
  %280 = vset.pattern.permute.xlu0 0
  %281 = vperm.xlu0 %280, %v271
  %v282 = vpop.permute.xlu0 %281
  %285 = vset.pattern.permute.xlu0 0
  %286 = vperm.xlu0 %285, %v272
  %v287 = vpop.permute.xlu0 %286
  %290 = vset.pattern.permute.xlu0 0
  %291 = vperm.xlu0 %290, %v273
  %v292 = vpop.permute.xlu0 %291
  %v294 = vmul.f32 %v266, %v277
  %v295 = vmul.f32 %v267, %v282
  %v296 = vmul.f32 %v268, %v287
  %v297 = vmul.f32 %v269, %v292
  %v298 = vpack.c.bf16 %v295, %v294
  %v299 = vpack.c.bf16 %v297, %v296
  %v300 = vld [vmem:[%s8] sm:$0xf]
  %v301 = vld [vmem:[%s8 + $0x4] sm:$0xf]
  %v302 = vld [vmem:[%s8 + $0x8] sm:$0xf]
  %v303 = vld [vmem:[%s8 + $0xc] sm:$0xf]
  %v304 = vld [vmem:[%s8 + $0x10] sm:$0xf]
  %v305 = vld [vmem:[%s8 + $0x14] sm:$0xf]
  %v306 = vld [vmem:[%s8 + $0x18] sm:$0xf]
  %v307 = vld [vmem:[%s8 + $0x1c] sm:$0xf]
  %v308 = vld [vmem:[%s8 + $0x20] sm:$0xf]
  %v309 = vld [vmem:[%s8 + $0x24] sm:$0xf]
  %v310 = vld [vmem:[%s8 + $0x28] sm:$0xf]
  %v311 = vld [vmem:[%s8 + $0x2c] sm:$0xf]
  %v312 = vld [vmem:[%s8 + $0x30] sm:$0xf]
  %v313 = vld [vmem:[%s8 + $0x34] sm:$0xf]
  %v314 = vld [vmem:[%s8 + $0x38] sm:$0xf]
  %v315 = vld [vmem:[%s8 + $0x3c] sm:$0xf]
  %v316 = vld [vmem:[%s9] sm:$0x1]
  %v318 = vlaneseq
  %v319 = vshrl.u32 %v318, 7
  %v320 = vsub.s32 0, %v319
  %v321 = vrot.slane %v316, %v320
  %v339 = vunpack.c.l.b16 %v300
  %v340 = vunpack.c.l.b16 %v301
  %v341 = vunpack.c.l.b16 %v302
  %v342 = vunpack.c.l.b16 %v303
  %v343 = vunpack.c.l.b16 %v304
  %v344 = vunpack.c.l.b16 %v305
  %v345 = vunpack.c.l.b16 %v306
  %v346 = vunpack.c.l.b16 %v307
  %v347 = vunpack.c.l.b16 %v308
  %v348 = vunpack.c.l.b16 %v309
  %v349 = vunpack.c.l.b16 %v310
  %v350 = vunpack.c.l.b16 %v311
  %v351 = vunpack.c.l.b16 %v312
  %v352 = vunpack.c.l.b16 %v313
  %v353 = vunpack.c.l.b16 %v314
  %v354 = vunpack.c.l.b16 %v315
  %v355 = vpack.c.b16 %v340, %v339
  %v356 = vpack.c.b16 %v342, %v341
  %v357 = vpack.c.b16 %v344, %v343
  %v358 = vpack.c.b16 %v346, %v345
  %v359 = vpack.c.b16 %v348, %v347
  %v360 = vpack.c.b16 %v350, %v349
  %v361 = vpack.c.b16 %v352, %v351
  %v362 = vpack.c.b16 %v354, %v353
  %371 = vmatprep.subr.bf16.mxu0 0
  %372 = vmatpush1.bf16.msra.mxu0 %v355
  %373 = vmatprep.subr.bf16.mxu0 0
  %374 = vmatpush1.bf16.msra.mxu0 %v356
  %375 = vmatprep.subr.bf16.mxu0 0
  %376 = vmatpush1.bf16.msra.mxu0 %v357
  %377 = vmatprep.subr.bf16.mxu0 0
  %378 = vmatpush1.bf16.msra.mxu0 %v358
  %379 = vmatprep.subr.bf16.mxu0 0
  %380 = vmatpush1.bf16.msra.mxu0 %v359
  %381 = vmatprep.subr.bf16.mxu0 0
  %382 = vmatpush1.bf16.msra.mxu0 %v360
  %383 = vmatprep.subr.bf16.mxu0 0
  %384 = vmatpush1.bf16.msra.mxu0 %v361
  %385 = vmatprep.subr.bf16.mxu0 0
  %386 = vmatpush1.bf16.msra.mxu0 %v362
  %387 = vmatprep.subr.bf16.mxu0 0
  %388 = vmatpush1.bf16.msra.mxu0 0
  %389 = vmatprep.subr.bf16.mxu0 0
  %390 = vmatpush1.bf16.msra.mxu0 0
  %391 = vmatprep.subr.bf16.mxu0 0
  %392 = vmatpush1.bf16.msra.mxu0 0
  %393 = vmatprep.subr.bf16.mxu0 0
  %394 = vmatpush1.bf16.msra.mxu0 0
  %395 = vmatprep.subr.bf16.mxu0 0
  %396 = vmatpush1.bf16.msra.mxu0 0
  %397 = vmatprep.subr.bf16.mxu0 0
  %398 = vmatpush1.bf16.msra.mxu0 0
  %399 = vmatprep.subr.bf16.mxu0 0
  %400 = vmatpush1.bf16.msra.mxu0 0
  %401 = vmatprep.subr.bf16.mxu0 0
  %402 = vmatpush1.bf16.msra.mxu0 0
  %403 = vmatprep.mubr.bf16.mxu0 0
  %404 = vmatmul.mubr.bf16.gmra.mrb[0].mxu0 %v298
  %v405 = vpop.f32.mrb[0].mxu0
  %v406 = vadd.f32 %v321, %v405
  %v407 = vpop.f32.mrb[0].mxu0
  %v408 = vpop.f32.mrb[0].mxu0
  %v409 = vadd.f32 %v321, %v408
  %v410 = vpop.f32.mrb[0].mxu0
  %411 = vmatprep.mubr.bf16.mxu0 0
  %412 = vmatmul.mubr.bf16.gmra.mrb[0].mxu0 %v299
  %v413 = vpop.f32.mrb[0].mxu0
  %v414 = vadd.f32 %v321, %v413
  %v415 = vpop.f32.mrb[0].mxu0
  %v416 = vpop.f32.mrb[0].mxu0
  %v417 = vadd.f32 %v321, %v416
  %v418 = vpop.f32.mrb[0].mxu0
  %419 = vdwg.mxu0
  %v420 = vld [vmem:[%s3] sm:$0xff]
  %v421 = vld [vmem:[%s3 + $0x8] sm:$0xff]
  %v422 = vld [vmem:[%s3 + $0x10] sm:$0xff]
  %v423 = vld [vmem:[%s3 + $0x18] sm:$0xff]
  %425 = vset.pattern.permute.xlu0 0
  %426 = vperm.xlu0 %425, %v420
  %v427 = vpop.permute.xlu0 %426
  %430 = vset.pattern.permute.xlu0 0
  %431 = vperm.xlu0 %430, %v421
  %v432 = vpop.permute.xlu0 %431
  %435 = vset.pattern.permute.xlu0 0
  %436 = vperm.xlu0 %435, %v422
  %v437 = vpop.permute.xlu0 %436
  %440 = vset.pattern.permute.xlu0 0
  %441 = vperm.xlu0 %440, %v423
  %v442 = vpop.permute.xlu0 %441
  %v444 = vmul.f32 %v406, %v427
  %v445 = vmul.f32 %v409, %v432
  %v446 = vmul.f32 %v414, %v437
  %v447 = vmul.f32 %v417, %v442
  %v448 = vtanh.pop %v444
  %v449 = vtanh.pop %v445
  %v450 = vtanh.pop %v446
  %v451 = vtanh.pop %v447
  %v452 = vld [vmem:[%s4] sm:$0xff]
  %vm453 = vcmask 261120
  %v455 = vsel %vm453, %v452, 0
  %457 = vmatprep.subr.mxu0 0.0
  %458 = vmatpush1.msra.mxu0 %v448
  %459 = vmatprep.subr.mxu0 0.0
  %460 = vmatpush1.msra.mxu0 %v449
  %461 = vmatprep.subr.mxu0 0.0
  %462 = vmatpush1.msra.mxu0 %v450
  %463 = vmatprep.subr.mxu0 0.0
  %464 = vmatpush1.msra.mxu0 %v451
  %465 = vmatprep.subr.mxu0 0.0
  %466 = vmatpush1.msra.mxu0 0.0
  %467 = vmatprep.subr.mxu0 0.0
  %468 = vmatpush1.msra.mxu0 0.0
  %469 = vmatprep.subr.mxu0 0.0
  %470 = vmatpush1.msra.mxu0 0.0
  %471 = vmatprep.subr.mxu0 0.0
  %472 = vmatpush1.msra.mxu0 0.0
  %473 = vmatprep.subr.mxu0 0.0
  %474 = vmatpush1.msra.mxu0 0.0
  %475 = vmatprep.subr.mxu0 0.0
  %476 = vmatpush1.msra.mxu0 0.0
  %477 = vmatprep.subr.mxu0 0.0
  %478 = vmatpush1.msra.mxu0 0.0
  %479 = vmatprep.subr.mxu0 0.0
  %480 = vmatpush1.msra.mxu0 0.0
  %481 = vmatprep.subr.mxu0 0.0
  %482 = vmatpush1.msra.mxu0 0.0
  %483 = vmatprep.subr.mxu0 0.0
  %484 = vmatpush1.msra.mxu0 0.0
  %485 = vmatprep.subr.mxu0 0.0
  %486 = vmatpush1.msra.mxu0 0.0
  %487 = vmatprep.subr.mxu0 0.0
  %488 = vmatpush1.msra.mxu0 0.0
  %489 = vmatprep.subr.mxu0 0.0
  %490 = vmatpush1.msra.mxu0 0.0
  %491 = vmatprep.subr.mxu0 0.0
  %492 = vmatpush1.msra.mxu0 0.0
  %493 = vmatprep.subr.mxu0 0.0
  %494 = vmatpush1.msra.mxu0 0.0
  %495 = vmatprep.subr.mxu0 0.0
  %496 = vmatpush1.msra.mxu0 0.0
  %497 = vmatprep.subr.mxu0 0.0
  %498 = vmatpush1.msra.mxu0 0.0
  %499 = vmatprep.subr.mxu0 0.0
  %500 = vmatpush1.msra.mxu0 0.0
  %501 = vmatprep.subr.mxu0 0.0
  %502 = vmatpush1.msra.mxu0 0.0
  %503 = vmatprep.subr.mxu0 0.0
  %504 = vmatpush1.msra.mxu0 0.0
  %505 = vmatprep.subr.mxu0 0.0
  %506 = vmatpush1.msra.mxu0 0.0
  %507 = vmatprep.subr.mxu0 0.0
  %508 = vmatpush1.msra.mxu0 0.0
  %509 = vmatprep.subr.mxu0 0.0
  %510 = vmatpush1.msra.mxu0 0.0
  %511 = vmatprep.subr.mxu0 0.0
  %512 = vmatpush1.msra.mxu0 0.0
  %513 = vmatprep.subr.mxu0 0.0
  %514 = vmatpush1.msra.mxu0 0.0
  %515 = vmatprep.subr.mxu0 0.0
  %516 = vmatpush1.msra.mxu0 0.0
  %517 = vmatprep.subr.mxu0 0.0
  %518 = vmatpush1.msra.mxu0 0.0
  %519 = vmatprep.subr.mxu0 0.0
  %520 = vmatpush1.msra.mxu0 0.0
  %521 = vmatprep.mubr.f32.mxu0 0.0
  %522 = vmatmul.mubr.f32.gmra.mrb[0].mxu0 %v455
  %v523 = vpop.f32.mrb[0].mxu0
  %v524 = vadd.f32 0.0, %v523
  %v525 = vpop.f32.mrb[0].mxu0
  %526 = vdwg.mxu0
  %v527 = vld [vmem:[%s10] sm:$0x1]
  %v529 = vlaneseq
  %v530 = vshrl.u32 %v529, 7
  %v531 = vsub.s32 0, %v530
  %v532 = vrot.slane %v527, %v531
  %v534 = vmul.f32 %v524, %v532
  %535 = vadd.xlane.f32.xlu0 %v534
  %v536 = vpop.xlane.xlu0 %535
  %v537 = vld [vmem:[#allocation2] sm:$0x1]
  %v538 = vld [vmem:[%s5] sm:$0xff]
  %v540 = vlaneseq
  %v541 = vshrl.u32 %v540, 7
  %v542 = vsub.s32 0, %v541
  %v543 = vrot.slane %v537, %v542
  %v545 = vmul.f32 %v543, %v538
  %v546 = vadd.f32 %v536, %v545
  %vm547 = vcmask 7168
  %548 = vst.msk [vmem:[%s12] sm:$0xff] %vm547, %v546
  // Predicated region
  $region50: #{xcar_forward.1} parent=0 // pred_check
    _
  $region51: #{xcar_forward.1} parent=0 // pred_check_branch
    %550 = sbr.rel (0) target = $region53
  $region52: #{xcar_forward.1} parent=0 // pred_region
    _
  $region53: #{xcar_forward.1} parent=0 // pred_fallthru
    _
  // Predicated region
  $region54: #{xcar_forward.1} parent=0 // pred_check
    _
  $region55: #{xcar_forward.1} parent=0 // pred_check_branch
    %552 = sbr.rel (0) target = $region57
  $region56: #{xcar_forward.1} parent=0 // pred_region
    _
  $region57: #{xcar_forward.1} parent=0 // pred_fallthru
    _

</llo_original>
